<compile_context>
chip_gen: v5e
topology: v5e:2x2
jax: 0.10.0
libtpu: 0.0.40
codegen_flags: <defaults>
</compile_context>

<pallas_src>
import jax
import jax.numpy as jnp
from jax.experimental import pallas as pl
from jax.experimental.pallas import tpu as pltpu

# ---- module-consistent (small) sizes ------------------------------------
INPUT_SIZE = 2
HIDDEN_SIZE = 32
NUM_COND_FEATURES = 16
NUM_LAYERS = 4

BATCH = 256            # rows per call
TILE_B = 128           # batch rows per grid step (>=2 grid steps keeps both v7x TCs busy)


def residual_mlp_kernel(
    x_ref,       # (TILE_B, INPUT_SIZE)          f32
    y_ref,       # (TILE_B, NUM_COND_FEATURES)   f32
    w0x_ref,     # (INPUT_SIZE, H)               bf16 -- init weight^T, x rows
    w0y_ref,     # (NUM_COND_FEATURES, H)        bf16 -- init weight^T, y rows
    b0_ref,      # (1, H)                        f32
    wres_ref,    # (L, H, H)                     bf16 -- per-layer weight^T
    bres_ref,    # (L, 1, H)                     f32
    wl_ref,      # (H, INPUT_SIZE)               bf16 -- last-layer weight^T
    bl_ref,      # (1, INPUT_SIZE)               f32
    o_ref,       # (TILE_B, INPUT_SIZE)          f32
):
    x = x_ref[...]                                   # keep f32 copy for the residual

    # init_layer: Linear(input+cond -> H) + ReLU, as a split dot (concat folded away).
    h = jnp.dot(x.astype(jnp.bfloat16), w0x_ref[...],
                preferred_element_type=jnp.float32)
    h = h + jnp.dot(y_ref[...].astype(jnp.bfloat16), w0y_ref[...],
                    preferred_element_type=jnp.float32)
    h = jnp.maximum(h + b0_ref[...], 0.0)

    # res_layers: L x (Linear(H -> H) + ReLU), sequential, statically unrolled.
    for i in range(NUM_LAYERS):
        h = jnp.dot(h.astype(jnp.bfloat16), wres_ref[i],
                    preferred_element_type=jnp.float32) + bres_ref[i]
        h = jnp.maximum(h, 0.0)

    # last_layer (H -> INPUT_SIZE) + residual add (f32), stored at true width.
    out = jnp.dot(h.astype(jnp.bfloat16), wl_ref[...],
                  preferred_element_type=jnp.float32) + bl_ref[...]
    o_ref[...] = (x + out).astype(o_ref.dtype)


def residual_mlp(x, y, params, tile_b=TILE_B):
    """x: (B, INPUT_SIZE) f32, y: (B, NUM_COND_FEATURES) f32 -> (B, INPUT_SIZE) f32."""
    w0x, w0y, b0, wres, bres, wl, bl = params
    B = x.shape[0]
    assert B % tile_b == 0, "batch must be a multiple of the tile size"

    grid = (B // tile_b,)
    return pl.pallas_call(
        residual_mlp_kernel,
        out_shape=jax.ShapeDtypeStruct((B, INPUT_SIZE), x.dtype),
        grid=grid,
        in_specs=[
            # batch-tiled activations (last dim = full array dim -> legal block)
            pl.BlockSpec((tile_b, INPUT_SIZE), lambda i: (i, 0)),
            pl.BlockSpec((tile_b, NUM_COND_FEATURES), lambda i: (i, 0)),
            # weights/biases: full arrays, resident across all grid steps
            pl.BlockSpec((INPUT_SIZE, HIDDEN_SIZE), lambda i: (0, 0)),
            pl.BlockSpec((NUM_COND_FEATURES, HIDDEN_SIZE), lambda i: (0, 0)),
            pl.BlockSpec((1, HIDDEN_SIZE), lambda i: (0, 0)),
            pl.BlockSpec((NUM_LAYERS, HIDDEN_SIZE, HIDDEN_SIZE), lambda i: (0, 0, 0)),
            pl.BlockSpec((NUM_LAYERS, 1, HIDDEN_SIZE), lambda i: (0, 0, 0)),
            pl.BlockSpec((HIDDEN_SIZE, INPUT_SIZE), lambda i: (0, 0)),
            pl.BlockSpec((1, INPUT_SIZE), lambda i: (0, 0)),
        ],
        out_specs=pl.BlockSpec((tile_b, INPUT_SIZE), lambda i: (i, 0)),
        compiler_params=pltpu.CompilerParams(
            dimension_semantics=("parallel",)),   # batch tiles shard across TCs (v7x)
    )(x, y, w0x, w0y, b0, wres, bres, wl, bl)


def init_params(key):
    """Deterministic synthetic parameters (PyTorch Linear default-init ranges).

    Weights are stored transposed (in, out) and cast to bf16 (MXU-native);
    biases stay f32.  The init-layer weight is pre-split into its x rows and
    y rows so the kernel can do the concat-free split dot.
    """
    ks = jax.random.split(key, 6)
    in_tot = INPUT_SIZE + NUM_COND_FEATURES
    lim0 = 1.0 / jnp.sqrt(in_tot)
    limh = 1.0 / jnp.sqrt(HIDDEN_SIZE)

    w0 = jax.random.uniform(ks[0], (in_tot, HIDDEN_SIZE), jnp.float32, -lim0, lim0)
    b0 = jax.random.uniform(ks[1], (1, HIDDEN_SIZE), jnp.float32, -lim0, lim0)

    wres = jax.random.uniform(
        ks[2], (NUM_LAYERS, HIDDEN_SIZE, HIDDEN_SIZE), jnp.float32, -limh, limh)
    bres = jax.random.uniform(
        ks[3], (NUM_LAYERS, 1, HIDDEN_SIZE), jnp.float32, -limh, limh)

    wl = jax.random.uniform(ks[4], (HIDDEN_SIZE, INPUT_SIZE), jnp.float32, -limh, limh)
    bl = jax.random.uniform(ks[5], (1, INPUT_SIZE), jnp.float32, -limh, limh)

    return (
        w0[:INPUT_SIZE].astype(jnp.bfloat16),     # w0x
        w0[INPUT_SIZE:].astype(jnp.bfloat16),     # w0y
        b0,
        wres.astype(jnp.bfloat16), bres,
        wl.astype(jnp.bfloat16), bl,
    )


def reference(x, y, params):
    """Pure-JAX reference with identical bf16-matmul / f32-accumulate recipe."""
    w0x, w0y, b0, wres, bres, wl, bl = params
    h = (jnp.dot(x.astype(jnp.bfloat16), w0x, preferred_element_type=jnp.float32)
         + jnp.dot(y.astype(jnp.bfloat16), w0y, preferred_element_type=jnp.float32)
         + b0)
    h = jax.nn.relu(h)
    for i in range(NUM_LAYERS):
        h = jax.nn.relu(
            jnp.dot(h.astype(jnp.bfloat16), wres[i],
                    preferred_element_type=jnp.float32) + bres[i])
    out = jnp.dot(h.astype(jnp.bfloat16), wl,
                  preferred_element_type=jnp.float32) + bl
    return x + out


if __name__ == "__main__":
    key = jax.random.PRNGKey(0)
    kx, ky, kp = jax.random.split(key, 3)
    x = jax.random.normal(kx, (BATCH, INPUT_SIZE), jnp.float32)
    y = jax.random.normal(ky, (BATCH, NUM_COND_FEATURES), jnp.float32)
    params = init_params(kp)

    result = residual_mlp(x, y, params)
    jax.block_until_ready(result)

    ref = reference(x, y, params)
    assert result.shape == (BATCH, INPUT_SIZE)
    assert jnp.allclose(result, ref, atol=1e-4, rtol=1e-4), "mismatch vs reference"
    print("KERNEL_OK")
</pallas_src>

<mosaic_0001>
module attributes {stable_mosaic.version = 11 : i64} {
  func.func @residual_mlp_kernel(%arg0: i32, %arg1: memref<128x2xf32, #tpu.memory_space<vmem>>, %arg2: memref<128x16xf32, #tpu.memory_space<vmem>>, %arg3: memref<2x32xbf16, #tpu.memory_space<vmem>>, %arg4: memref<16x32xbf16, #tpu.memory_space<vmem>>, %arg5: memref<1x32xf32, #tpu.memory_space<vmem>>, %arg6: memref<4x32x32xbf16, #tpu.memory_space<vmem>>, %arg7: memref<4x1x32xf32, #tpu.memory_space<vmem>>, %arg8: memref<32x2xbf16, #tpu.memory_space<vmem>>, %arg9: memref<1x2xf32, #tpu.memory_space<vmem>>, %arg10: memref<128x2xf32, #tpu.memory_space<vmem>>) attributes {dimension_semantics = [#tpu.dimension_semantics<parallel>], iteration_bounds = array<i64: 2>, scalar_prefetch = 0 : i64, scratch_operands = 0 : i64, tpu.core_type = #tpu.core_type<tc>, window_params = [{transform_indices = @transform_0, window_bounds = array<i64: 128, 2>}, {transform_indices = @transform_1, window_bounds = array<i64: 128, 16>}, {pipeline_mode = #tpu.pipeline_mode<synchronous>, transform_indices = @transform_2, window_bounds = array<i64: 2, 32>}, {pipeline_mode = #tpu.pipeline_mode<synchronous>, transform_indices = @transform_3, window_bounds = array<i64: 16, 32>}, {pipeline_mode = #tpu.pipeline_mode<synchronous>, transform_indices = @transform_4, window_bounds = array<i64: 1, 32>}, {pipeline_mode = #tpu.pipeline_mode<synchronous>, transform_indices = @transform_5, window_bounds = array<i64: 4, 32, 32>}, {pipeline_mode = #tpu.pipeline_mode<synchronous>, transform_indices = @transform_6, window_bounds = array<i64: 4, 1, 32>}, {pipeline_mode = #tpu.pipeline_mode<synchronous>, transform_indices = @transform_7, window_bounds = array<i64: 32, 2>}, {pipeline_mode = #tpu.pipeline_mode<synchronous>, transform_indices = @transform_8, window_bounds = array<i64: 1, 2>}, {transform_indices = @transform_9, window_bounds = array<i64: 128, 2>}]} {
    %c0 = arith.constant 0 : index
    %c0_0 = arith.constant 0 : index
    %0 = vector.load %arg1[%c0, %c0_0] : memref<128x2xf32, #tpu.memory_space<vmem>>, vector<128x2xf32>
    %1 = arith.truncf %0 : vector<128x2xf32> to vector<128x2xbf16>
    %c0_1 = arith.constant 0 : index
    %c0_2 = arith.constant 0 : index
    %2 = vector.load %arg3[%c0_1, %c0_2] : memref<2x32xbf16, #tpu.memory_space<vmem>>, vector<2x32xbf16>
    %cst = arith.constant dense<0.000000e+00> : vector<128x32xf32>
    %3 = tpu.matmul %1, %2, %cst {dimension_numbers = #tpu.dot_dimension_numbers<[1], [0], [0], [1], [0, 0, 1, 1], [], []>} : vector<128x2xbf16>, vector<2x32xbf16>, vector<128x32xf32> -> vector<128x32xf32>
    %c0_3 = arith.constant 0 : index
    %c0_4 = arith.constant 0 : index
    %4 = vector.load %arg2[%c0_3, %c0_4] : memref<128x16xf32, #tpu.memory_space<vmem>>, vector<128x16xf32>
    %5 = arith.truncf %4 : vector<128x16xf32> to vector<128x16xbf16>
    %c0_5 = arith.constant 0 : index
    %c0_6 = arith.constant 0 : index
    %6 = vector.load %arg4[%c0_5, %c0_6] : memref<16x32xbf16, #tpu.memory_space<vmem>>, vector<16x32xbf16>
    %cst_7 = arith.constant dense<0.000000e+00> : vector<128x32xf32>
    %7 = tpu.matmul %5, %6, %cst_7 {dimension_numbers = #tpu.dot_dimension_numbers<[1], [0], [0], [1], [0, 0, 1, 1], [], []>} : vector<128x16xbf16>, vector<16x32xbf16>, vector<128x32xf32> -> vector<128x32xf32>
    %8 = arith.addf %3, %7 : vector<128x32xf32>
    %c0_8 = arith.constant 0 : index
    %c0_9 = arith.constant 0 : index
    %9 = vector.load %arg5[%c0_8, %c0_9] : memref<1x32xf32, #tpu.memory_space<vmem>>, vector<1x32xf32>
    %10 = vector.broadcast %9 : vector<1x32xf32> to vector<128x32xf32>
    %11 = arith.addf %8, %10 : vector<128x32xf32>
    %cst_10 = arith.constant 0.000000e+00 : f32
    %12 = vector.broadcast %cst_10 : f32 to vector<128x32xf32>
    %13 = arith.maximumf %11, %12 : vector<128x32xf32>
    %14 = arith.truncf %13 : vector<128x32xf32> to vector<128x32xbf16>
    %c0_11 = arith.constant 0 : index
    %c0_12 = arith.constant 0 : index
    %c0_13 = arith.constant 0 : index
    %15 = vector.load %arg6[%c0_11, %c0_12, %c0_13] : memref<4x32x32xbf16, #tpu.memory_space<vmem>>, vector<1x32x32xbf16>
    %16 = vector.shape_cast %15 : vector<1x32x32xbf16> to vector<32x32xbf16>
    %cst_14 = arith.constant dense<0.000000e+00> : vector<128x32xf32>
    %17 = tpu.matmul %14, %16, %cst_14 {dimension_numbers = #tpu.dot_dimension_numbers<[1], [0], [0], [1], [0, 0, 1, 1], [], []>} : vector<128x32xbf16>, vector<32x32xbf16>, vector<128x32xf32> -> vector<128x32xf32>
    %c0_15 = arith.constant 0 : index
    %c0_16 = arith.constant 0 : index
    %c0_17 = arith.constant 0 : index
    %18 = vector.load %arg7[%c0_15, %c0_16, %c0_17] : memref<4x1x32xf32, #tpu.memory_space<vmem>>, vector<1x1x32xf32>
    %19 = vector.shape_cast %18 : vector<1x1x32xf32> to vector<1x32xf32>
    %20 = vector.broadcast %19 : vector<1x32xf32> to vector<128x32xf32>
    %21 = arith.addf %17, %20 : vector<128x32xf32>
    %cst_18 = arith.constant 0.000000e+00 : f32
    %22 = vector.broadcast %cst_18 : f32 to vector<128x32xf32>
    %23 = arith.maximumf %21, %22 : vector<128x32xf32>
    %24 = arith.truncf %23 : vector<128x32xf32> to vector<128x32xbf16>
    %c1 = arith.constant 1 : index
    %c0_19 = arith.constant 0 : index
    %c0_20 = arith.constant 0 : index
    %25 = vector.load %arg6[%c1, %c0_19, %c0_20] : memref<4x32x32xbf16, #tpu.memory_space<vmem>>, vector<1x32x32xbf16>
    %26 = vector.shape_cast %25 : vector<1x32x32xbf16> to vector<32x32xbf16>
    %cst_21 = arith.constant dense<0.000000e+00> : vector<128x32xf32>
    %27 = tpu.matmul %24, %26, %cst_21 {dimension_numbers = #tpu.dot_dimension_numbers<[1], [0], [0], [1], [0, 0, 1, 1], [], []>} : vector<128x32xbf16>, vector<32x32xbf16>, vector<128x32xf32> -> vector<128x32xf32>
    %c1_22 = arith.constant 1 : index
    %c0_23 = arith.constant 0 : index
    %c0_24 = arith.constant 0 : index
    %28 = vector.load %arg7[%c1_22, %c0_23, %c0_24] : memref<4x1x32xf32, #tpu.memory_space<vmem>>, vector<1x1x32xf32>
    %29 = vector.shape_cast %28 : vector<1x1x32xf32> to vector<1x32xf32>
    %30 = vector.broadcast %29 : vector<1x32xf32> to vector<128x32xf32>
    %31 = arith.addf %27, %30 : vector<128x32xf32>
    %cst_25 = arith.constant 0.000000e+00 : f32
    %32 = vector.broadcast %cst_25 : f32 to vector<128x32xf32>
    %33 = arith.maximumf %31, %32 : vector<128x32xf32>
    %34 = arith.truncf %33 : vector<128x32xf32> to vector<128x32xbf16>
    %c2 = arith.constant 2 : index
    %c0_26 = arith.constant 0 : index
    %c0_27 = arith.constant 0 : index
    %35 = vector.load %arg6[%c2, %c0_26, %c0_27] : memref<4x32x32xbf16, #tpu.memory_space<vmem>>, vector<1x32x32xbf16>
    %36 = vector.shape_cast %35 : vector<1x32x32xbf16> to vector<32x32xbf16>
    %cst_28 = arith.constant dense<0.000000e+00> : vector<128x32xf32>
    %37 = tpu.matmul %34, %36, %cst_28 {dimension_numbers = #tpu.dot_dimension_numbers<[1], [0], [0], [1], [0, 0, 1, 1], [], []>} : vector<128x32xbf16>, vector<32x32xbf16>, vector<128x32xf32> -> vector<128x32xf32>
    %c2_29 = arith.constant 2 : index
    %c0_30 = arith.constant 0 : index
    %c0_31 = arith.constant 0 : index
    %38 = vector.load %arg7[%c2_29, %c0_30, %c0_31] : memref<4x1x32xf32, #tpu.memory_space<vmem>>, vector<1x1x32xf32>
    %39 = vector.shape_cast %38 : vector<1x1x32xf32> to vector<1x32xf32>
    %40 = vector.broadcast %39 : vector<1x32xf32> to vector<128x32xf32>
    %41 = arith.addf %37, %40 : vector<128x32xf32>
    %cst_32 = arith.constant 0.000000e+00 : f32
    %42 = vector.broadcast %cst_32 : f32 to vector<128x32xf32>
    %43 = arith.maximumf %41, %42 : vector<128x32xf32>
    %44 = arith.truncf %43 : vector<128x32xf32> to vector<128x32xbf16>
    %c3 = arith.constant 3 : index
    %c0_33 = arith.constant 0 : index
    %c0_34 = arith.constant 0 : index
    %45 = vector.load %arg6[%c3, %c0_33, %c0_34] : memref<4x32x32xbf16, #tpu.memory_space<vmem>>, vector<1x32x32xbf16>
    %46 = vector.shape_cast %45 : vector<1x32x32xbf16> to vector<32x32xbf16>
    %cst_35 = arith.constant dense<0.000000e+00> : vector<128x32xf32>
    %47 = tpu.matmul %44, %46, %cst_35 {dimension_numbers = #tpu.dot_dimension_numbers<[1], [0], [0], [1], [0, 0, 1, 1], [], []>} : vector<128x32xbf16>, vector<32x32xbf16>, vector<128x32xf32> -> vector<128x32xf32>
    %c3_36 = arith.constant 3 : index
    %c0_37 = arith.constant 0 : index
    %c0_38 = arith.constant 0 : index
    %48 = vector.load %arg7[%c3_36, %c0_37, %c0_38] : memref<4x1x32xf32, #tpu.memory_space<vmem>>, vector<1x1x32xf32>
    %49 = vector.shape_cast %48 : vector<1x1x32xf32> to vector<1x32xf32>
    %50 = vector.broadcast %49 : vector<1x32xf32> to vector<128x32xf32>
    %51 = arith.addf %47, %50 : vector<128x32xf32>
    %cst_39 = arith.constant 0.000000e+00 : f32
    %52 = vector.broadcast %cst_39 : f32 to vector<128x32xf32>
    %53 = arith.maximumf %51, %52 : vector<128x32xf32>
    %54 = arith.truncf %53 : vector<128x32xf32> to vector<128x32xbf16>
    %c0_40 = arith.constant 0 : index
    %c0_41 = arith.constant 0 : index
    %55 = vector.load %arg8[%c0_40, %c0_41] : memref<32x2xbf16, #tpu.memory_space<vmem>>, vector<32x2xbf16>
    %cst_42 = arith.constant dense<0.000000e+00> : vector<128x2xf32>
    %56 = tpu.matmul %54, %55, %cst_42 {dimension_numbers = #tpu.dot_dimension_numbers<[1], [0], [0], [1], [0, 0, 1, 1], [], []>} : vector<128x32xbf16>, vector<32x2xbf16>, vector<128x2xf32> -> vector<128x2xf32>
    %c0_43 = arith.constant 0 : index
    %c0_44 = arith.constant 0 : index
    %57 = vector.load %arg9[%c0_43, %c0_44] : memref<1x2xf32, #tpu.memory_space<vmem>>, vector<1x2xf32>
    %58 = vector.broadcast %57 : vector<1x2xf32> to vector<128x2xf32>
    %59 = arith.addf %56, %58 : vector<128x2xf32>
    %60 = arith.addf %0, %59 : vector<128x2xf32>
    %c0_45 = arith.constant 0 : index
    %c0_46 = arith.constant 0 : index
    %61 = vector.load %arg10[%c0_45, %c0_46] : memref<128x2xf32, #tpu.memory_space<vmem>>, vector<128x2xf32>
    tpu.vector_store %arg10[%c0_45, %c0_46], %60 {strides = array<i32>} : memref<128x2xf32, #tpu.memory_space<vmem>>, vector<128x2xf32>,
    return
  }
  func.func @transform_0(%arg0: i32) -> (i32, i32) {
    %c0_i32 = arith.constant 0 : i32
    %c0_i32_0 = arith.constant 0 : i32
    return %arg0, %c0_i32 : i32, i32
  }
  func.func @transform_1(%arg0: i32) -> (i32, i32) {
    %c0_i32 = arith.constant 0 : i32
    %c0_i32_0 = arith.constant 0 : i32
    return %arg0, %c0_i32 : i32, i32
  }
  func.func @transform_2(%arg0: i32) -> (i32, i32) {
    %c0_i32 = arith.constant 0 : i32
    %c0_i32_0 = arith.constant 0 : i32
    %c0_i32_1 = arith.constant 0 : i32
    return %c0_i32, %c0_i32_0 : i32, i32
  }
  func.func @transform_3(%arg0: i32) -> (i32, i32) {
    %c0_i32 = arith.constant 0 : i32
    %c0_i32_0 = arith.constant 0 : i32
    %c0_i32_1 = arith.constant 0 : i32
    return %c0_i32, %c0_i32_0 : i32, i32
  }
  func.func @transform_4(%arg0: i32) -> (i32, i32) {
    %c0_i32 = arith.constant 0 : i32
    %c0_i32_0 = arith.constant 0 : i32
    %c0_i32_1 = arith.constant 0 : i32
    return %c0_i32, %c0_i32_0 : i32, i32
  }
  func.func @transform_5(%arg0: i32) -> (i32, i32, i32) {
    %c0_i32 = arith.constant 0 : i32
    %c0_i32_0 = arith.constant 0 : i32
    %c0_i32_1 = arith.constant 0 : i32
    %c0_i32_2 = arith.constant 0 : i32
    return %c0_i32, %c0_i32_0, %c0_i32_1 : i32, i32, i32
  }
  func.func @transform_6(%arg0: i32) -> (i32, i32, i32) {
    %c0_i32 = arith.constant 0 : i32
    %c0_i32_0 = arith.constant 0 : i32
    %c0_i32_1 = arith.constant 0 : i32
    %c0_i32_2 = arith.constant 0 : i32
    return %c0_i32, %c0_i32_0, %c0_i32_1 : i32, i32, i32
  }
  func.func @transform_7(%arg0: i32) -> (i32, i32) {
    %c0_i32 = arith.constant 0 : i32
    %c0_i32_0 = arith.constant 0 : i32
    %c0_i32_1 = arith.constant 0 : i32
    return %c0_i32, %c0_i32_0 : i32, i32
  }
  func.func @transform_8(%arg0: i32) -> (i32, i32) {
    %c0_i32 = arith.constant 0 : i32
    %c0_i32_0 = arith.constant 0 : i32
    %c0_i32_1 = arith.constant 0 : i32
    return %c0_i32, %c0_i32_0 : i32, i32
  }
  func.func @transform_9(%arg0: i32) -> (i32, i32) {
    %c0_i32 = arith.constant 0 : i32
    %c0_i32_0 = arith.constant 0 : i32
    return %arg0, %c0_i32 : i32, i32
  }
}

</mosaic_0001>

<llo_original>
// kernel: tpu_custom_call.1
$region0: #{tpu_custom_call.1}
  #allocation0 [shape = 'u32[]', space=smem, size = 0x4, offset = 0x4, fixed_abs, tag = 'smem constant byte address 0x4 - core index']
  #allocation1 [shape = 'u32[72,128]{1,0:T(1,128)}', space=vmem, size = 0x9000, scoped, tag = 'internal scratch']
  %s0 = inlined_call_operand.vmem [shape: f32[256,2], index: 0, kind: input, shape index: {}]
  %s1 = inlined_call_operand.vmem [shape: f32[256,16], index: 1, kind: input, shape index: {}]
  %s2 = inlined_call_operand.vmem [shape: bf16[2,32], index: 2, kind: input, shape index: {}]
  %s3 = inlined_call_operand.vmem [shape: bf16[16,32], index: 3, kind: input, shape index: {}]
  %s4 = inlined_call_operand.vmem [shape: f32[1,32], index: 4, kind: input, shape index: {}]
  %s5 = inlined_call_operand.vmem [shape: bf16[4,32,32], index: 5, kind: input, shape index: {}]
  %s6 = inlined_call_operand.vmem [shape: f32[4,1,32], index: 6, kind: input, shape index: {}]
  %s7 = inlined_call_operand.vmem [shape: bf16[32,2], index: 7, kind: input, shape index: {}]
  %s8 = inlined_call_operand.vmem [shape: f32[1,2], index: 8, kind: input, shape index: {}]
  %s9 = inlined_call_operand.vmem [shape: f32[256,2], index: 9, kind: output, shape index: {}]
  %s10 = sld [smem:[#allocation0]]
  $region69: #{tpu_custom_call.1} parent=0
    _
  %s12 = ssub.s32 1, %s10
  %s13 = scalar_select 0, %s12, %s10
  loop: start=0, step=1, limit=4
  $region2: #{tpu_custom_call.1} parent=0 // loop_pre_header
    _
  $region3: #{tpu_custom_call.1} parent=0 // loop_header
    %s15 = sphi 0, %s19
    %p16 = scmp.ge.s32.totalorder %s15, 4
    %s25 = sphi 0, %s27
    %s28 = sphi 0, %s25
    %s29 = sphi 0, %s28
    %s45 = sphi 0, %s29
    %s51 = sphi 0, %s53
    %s54 = sphi 0, %s51
    %s55 = sphi 0, %s54
    %s71 = sphi 0, %s55
    %s75 = sphi 0, %s75
    %s77 = sphi 0, %s75
    %s78 = sphi 0, %s77
    %s92 = sphi 0, %s78
    %s96 = sphi 0, %s96
    %s98 = sphi 0, %s96
    %s99 = sphi 0, %s98
    %s113 = sphi 0, %s99
    %s117 = sphi 0, %s117
    %s119 = sphi 0, %s117
    %s120 = sphi 0, %s119
    %s134 = sphi 0, %s120
    %s138 = sphi 0, %s138
    %s140 = sphi 0, %s138
    %s141 = sphi 0, %s140
    %s155 = sphi 0, %s141
    %s159 = sphi 0, %s159
    %s161 = sphi 0, %s159
    %s162 = sphi 0, %s161
    %s176 = sphi 0, %s162
    %s180 = sphi 0, %s180
    %s182 = sphi 0, %s180
    %s183 = sphi 0, %s182
    %s197 = sphi 0, %s183
    %s201 = sphi 0, %s201
    %s203 = sphi 0, %s201
    %s204 = sphi 0, %s203
    %s218 = sphi 0, %s204
    %s224 = sphi 0, %s226
    %s227 = sphi 0, %s224
    %s228 = sphi 0, %s227
    %s244 = sphi 0, %s228
  $region4: #{tpu_custom_call.1} parent=0 // loop_header_branch
    %18 = sbr.rel (%p16) target = $region8
  $region5: #{tpu_custom_call.1} parent=0 // loop_body
    %s20 = ssub.s32 %s15, 1
    %s21 = ssub.s32 %s15, 2
    %s22 = sadd.s32 %s15, 1
    %s23 = ssub.s32 %s15, %s22
    %p24 = scmp.eq.s32.totalorder %s23, 0
    %s26 = sadd.s32 %s25, 1
    %s27 = scalar_select %p24, %s25, %s26
    %p30 = pneg %p24
    %p31 = scmp.eq.s32.totalorder %s15, 1
    %p32 = por %p30, %p31
    %p33 = scmp.ne.s32.totalorder %s25, %s28
    %p34 = scmp.eq.s32.totalorder %s15, 0
    %p35 = por %p33, %p34
    %p36 = scmp.ne.s32.totalorder %s25, %s28
    %p37 = scmp.eq.s32.totalorder %s20, 1
    %p38 = por %p36, %p37
    %p39 = scmp.ne.s32.totalorder %s28, %s29
    %p40 = scmp.eq.s32.totalorder %s20, 0
    %p41 = por %p39, %p40
    %p42 = scmp.ne.s32.totalorder %s28, %s29
    %p43 = scmp.eq.s32.totalorder %s21, 1
    %p44 = por %p42, %p43
    %p46 = scmp.ne.s32.totalorder %s29, %s45
    %p47 = scmp.eq.s32.totalorder %s21, 0
    %p48 = por %p46, %p47
    %s49 = ssub.s32 %s15, %s22
    %p50 = scmp.eq.s32.totalorder %s49, 0
    %s52 = sadd.s32 %s51, 1
    %s53 = scalar_select %p50, %s51, %s52
    %p56 = pneg %p50
    %p57 = scmp.eq.s32.totalorder %s15, 1
    %p58 = por %p56, %p57
    %p59 = scmp.ne.s32.totalorder %s51, %s54
    %p60 = scmp.eq.s32.totalorder %s15, 0
    %p61 = por %p59, %p60
    %p62 = scmp.ne.s32.totalorder %s51, %s54
    %p63 = scmp.eq.s32.totalorder %s20, 1
    %p64 = por %p62, %p63
    %p65 = scmp.ne.s32.totalorder %s54, %s55
    %p66 = scmp.eq.s32.totalorder %s20, 0
    %p67 = por %p65, %p66
    %p68 = scmp.ne.s32.totalorder %s54, %s55
    %p69 = scmp.eq.s32.totalorder %s21, 1
    %p70 = por %p68, %p69
    %p72 = scmp.ne.s32.totalorder %s55, %s71
    %p73 = scmp.eq.s32.totalorder %s21, 0
    %p74 = por %p72, %p73
    %s76 = sadd.s32 %s75, 1
    %p79 = scmp.eq.s32.totalorder %s15, 1
    %p80 = scmp.ne.s32.totalorder %s75, %s77
    %p81 = scmp.eq.s32.totalorder %s15, 0
    %p82 = por %p80, %p81
    %p83 = scmp.ne.s32.totalorder %s75, %s77
    %p84 = scmp.eq.s32.totalorder %s20, 1
    %p85 = por %p83, %p84
    %p86 = scmp.ne.s32.totalorder %s77, %s78
    %p87 = scmp.eq.s32.totalorder %s20, 0
    %p88 = por %p86, %p87
    %p89 = scmp.ne.s32.totalorder %s77, %s78
    %p90 = scmp.eq.s32.totalorder %s21, 1
    %p91 = por %p89, %p90
    %p93 = scmp.ne.s32.totalorder %s78, %s92
    %p94 = scmp.eq.s32.totalorder %s21, 0
    %p95 = por %p93, %p94
    %s97 = sadd.s32 %s96, 1
    %p100 = scmp.eq.s32.totalorder %s15, 1
    %p101 = scmp.ne.s32.totalorder %s96, %s98
    %p102 = scmp.eq.s32.totalorder %s15, 0
    %p103 = por %p101, %p102
    %p104 = scmp.ne.s32.totalorder %s96, %s98
    %p105 = scmp.eq.s32.totalorder %s20, 1
    %p106 = por %p104, %p105
    %p107 = scmp.ne.s32.totalorder %s98, %s99
    %p108 = scmp.eq.s32.totalorder %s20, 0
    %p109 = por %p107, %p108
    %p110 = scmp.ne.s32.totalorder %s98, %s99
    %p111 = scmp.eq.s32.totalorder %s21, 1
    %p112 = por %p110, %p111
    %p114 = scmp.ne.s32.totalorder %s99, %s113
    %p115 = scmp.eq.s32.totalorder %s21, 0
    %p116 = por %p114, %p115
    %s118 = sadd.s32 %s117, 1
    %p121 = scmp.eq.s32.totalorder %s15, 1
    %p122 = scmp.ne.s32.totalorder %s117, %s119
    %p123 = scmp.eq.s32.totalorder %s15, 0
    %p124 = por %p122, %p123
    %p125 = scmp.ne.s32.totalorder %s117, %s119
    %p126 = scmp.eq.s32.totalorder %s20, 1
    %p127 = por %p125, %p126
    %p128 = scmp.ne.s32.totalorder %s119, %s120
    %p129 = scmp.eq.s32.totalorder %s20, 0
    %p130 = por %p128, %p129
    %p131 = scmp.ne.s32.totalorder %s119, %s120
    %p132 = scmp.eq.s32.totalorder %s21, 1
    %p133 = por %p131, %p132
    %p135 = scmp.ne.s32.totalorder %s120, %s134
    %p136 = scmp.eq.s32.totalorder %s21, 0
    %p137 = por %p135, %p136
    %s139 = sadd.s32 %s138, 1
    %p142 = scmp.eq.s32.totalorder %s15, 1
    %p143 = scmp.ne.s32.totalorder %s138, %s140
    %p144 = scmp.eq.s32.totalorder %s15, 0
    %p145 = por %p143, %p144
    %p146 = scmp.ne.s32.totalorder %s138, %s140
    %p147 = scmp.eq.s32.totalorder %s20, 1
    %p148 = por %p146, %p147
    %p149 = scmp.ne.s32.totalorder %s140, %s141
    %p150 = scmp.eq.s32.totalorder %s20, 0
    %p151 = por %p149, %p150
    %p152 = scmp.ne.s32.totalorder %s140, %s141
    %p153 = scmp.eq.s32.totalorder %s21, 1
    %p154 = por %p152, %p153
    %p156 = scmp.ne.s32.totalorder %s141, %s155
    %p157 = scmp.eq.s32.totalorder %s21, 0
    %p158 = por %p156, %p157
    %s160 = sadd.s32 %s159, 1
    %p163 = scmp.eq.s32.totalorder %s15, 1
    %p164 = scmp.ne.s32.totalorder %s159, %s161
    %p165 = scmp.eq.s32.totalorder %s15, 0
    %p166 = por %p164, %p165
    %p167 = scmp.ne.s32.totalorder %s159, %s161
    %p168 = scmp.eq.s32.totalorder %s20, 1
    %p169 = por %p167, %p168
    %p170 = scmp.ne.s32.totalorder %s161, %s162
    %p171 = scmp.eq.s32.totalorder %s20, 0
    %p172 = por %p170, %p171
    %p173 = scmp.ne.s32.totalorder %s161, %s162
    %p174 = scmp.eq.s32.totalorder %s21, 1
    %p175 = por %p173, %p174
    %p177 = scmp.ne.s32.totalorder %s162, %s176
    %p178 = scmp.eq.s32.totalorder %s21, 0
    %p179 = por %p177, %p178
    %s181 = sadd.s32 %s180, 1
    %p184 = scmp.eq.s32.totalorder %s15, 1
    %p185 = scmp.ne.s32.totalorder %s180, %s182
    %p186 = scmp.eq.s32.totalorder %s15, 0
    %p187 = por %p185, %p186
    %p188 = scmp.ne.s32.totalorder %s180, %s182
    %p189 = scmp.eq.s32.totalorder %s20, 1
    %p190 = por %p188, %p189
    %p191 = scmp.ne.s32.totalorder %s182, %s183
    %p192 = scmp.eq.s32.totalorder %s20, 0
    %p193 = por %p191, %p192
    %p194 = scmp.ne.s32.totalorder %s182, %s183
    %p195 = scmp.eq.s32.totalorder %s21, 1
    %p196 = por %p194, %p195
    %p198 = scmp.ne.s32.totalorder %s183, %s197
    %p199 = scmp.eq.s32.totalorder %s21, 0
    %p200 = por %p198, %p199
    %s202 = sadd.s32 %s201, 1
    %p205 = scmp.eq.s32.totalorder %s15, 1
    %p206 = scmp.ne.s32.totalorder %s201, %s203
    %p207 = scmp.eq.s32.totalorder %s15, 0
    %p208 = por %p206, %p207
    %p209 = scmp.ne.s32.totalorder %s201, %s203
    %p210 = scmp.eq.s32.totalorder %s20, 1
    %p211 = por %p209, %p210
    %p212 = scmp.ne.s32.totalorder %s203, %s204
    %p213 = scmp.eq.s32.totalorder %s20, 0
    %p214 = por %p212, %p213
    %p215 = scmp.ne.s32.totalorder %s203, %s204
    %p216 = scmp.eq.s32.totalorder %s21, 1
    %p217 = por %p215, %p216
    %p219 = scmp.ne.s32.totalorder %s204, %s218
    %p220 = scmp.eq.s32.totalorder %s21, 0
    %p221 = por %p219, %p220
    %s222 = ssub.s32 %s15, %s22
    %p223 = scmp.eq.s32.totalorder %s222, 0
    %s225 = sadd.s32 %s224, 1
    %s226 = scalar_select %p223, %s224, %s225
    %p229 = pneg %p223
    %p230 = scmp.eq.s32.totalorder %s15, 1
    %p231 = por %p229, %p230
    %p232 = scmp.ne.s32.totalorder %s224, %s227
    %p233 = scmp.eq.s32.totalorder %s15, 0
    %p234 = por %p232, %p233
    %p235 = scmp.ne.s32.totalorder %s224, %s227
    %p236 = scmp.eq.s32.totalorder %s20, 1
    %p237 = por %p235, %p236
    %p238 = scmp.ne.s32.totalorder %s227, %s228
    %p239 = scmp.eq.s32.totalorder %s20, 0
    %p240 = por %p238, %p239
    %p241 = scmp.ne.s32.totalorder %s227, %s228
    %p242 = scmp.eq.s32.totalorder %s21, 1
    %p243 = por %p241, %p242
    %p245 = scmp.ne.s32.totalorder %s228, %s244
    %p246 = scmp.eq.s32.totalorder %s21, 0
    %p247 = por %p245, %p246
    %p248 = scmp.le.s32.totalorder 1, %s15
    %p249 = scmp.lt.s32.totalorder %s15, 3
    %p250 = pnand %p248, %p249
    %p251 = pneg %p250
    // Predicated region
    $region9: #{tpu_custom_call.1} parent=5 // pred_check
      _
    $region10: #{tpu_custom_call.1} parent=5 // pred_check_branch
      %253 = sbr.rel (%p250) target = $region12
    $region11: #{tpu_custom_call.1} parent=5 // pred_region
      %s254 = ssub.s32 %s15, 1
      // Predicated region
      $region13: #{tpu_custom_call.1} parent=11 // pred_check
        %p255 = pneg %p88
      $region14: #{tpu_custom_call.1} parent=11 // pred_check_branch
        %257 = sbr.rel (%p255) target = $region16
      $region15: #{tpu_custom_call.1} parent=11 // pred_region
        _
      $region16: #{tpu_custom_call.1} parent=11 // pred_fallthru
        _
      // Predicated region
      $region17: #{tpu_custom_call.1} parent=11 // pred_check
        %p258 = pneg %p109
      $region18: #{tpu_custom_call.1} parent=11 // pred_check_branch
        %260 = sbr.rel (%p258) target = $region20
      $region19: #{tpu_custom_call.1} parent=11 // pred_region
        _
      $region20: #{tpu_custom_call.1} parent=11 // pred_fallthru
        _
      // Predicated region
      $region21: #{tpu_custom_call.1} parent=11 // pred_check
        %p261 = pneg %p130
      $region22: #{tpu_custom_call.1} parent=11 // pred_check_branch
        %263 = sbr.rel (%p261) target = $region24
      $region23: #{tpu_custom_call.1} parent=11 // pred_region
        _
      $region24: #{tpu_custom_call.1} parent=11 // pred_fallthru
        _
      // Predicated region
      $region25: #{tpu_custom_call.1} parent=11 // pred_check
        %p264 = pneg %p151
      $region26: #{tpu_custom_call.1} parent=11 // pred_check_branch
        %266 = sbr.rel (%p264) target = $region28
      $region27: #{tpu_custom_call.1} parent=11 // pred_region
        _
      $region28: #{tpu_custom_call.1} parent=11 // pred_fallthru
        _
      // Predicated region
      $region29: #{tpu_custom_call.1} parent=11 // pred_check
        %p267 = pneg %p172
      $region30: #{tpu_custom_call.1} parent=11 // pred_check_branch
        %269 = sbr.rel (%p267) target = $region32
      $region31: #{tpu_custom_call.1} parent=11 // pred_region
        _
      $region32: #{tpu_custom_call.1} parent=11 // pred_fallthru
        _
      // Predicated region
      $region33: #{tpu_custom_call.1} parent=11 // pred_check
        %p270 = pneg %p193
      $region34: #{tpu_custom_call.1} parent=11 // pred_check_branch
        %272 = sbr.rel (%p270) target = $region36
      $region35: #{tpu_custom_call.1} parent=11 // pred_region
        _
      $region36: #{tpu_custom_call.1} parent=11 // pred_fallthru
        _
      // Predicated region
      $region37: #{tpu_custom_call.1} parent=11 // pred_check
        %p273 = pneg %p214
      $region38: #{tpu_custom_call.1} parent=11 // pred_check_branch
        %275 = sbr.rel (%p273) target = $region40
      $region39: #{tpu_custom_call.1} parent=11 // pred_region
        _
      $region40: #{tpu_custom_call.1} parent=11 // pred_fallthru
        _
    $region12: #{tpu_custom_call.1} parent=5 // pred_fallthru
      _
    %p276 = scmp.lt.s32.totalorder %s15, 2
    // Predicated region
    $region41: #{tpu_custom_call.1} parent=5 // pred_check
      %p277 = pneg %p276
    $region42: #{tpu_custom_call.1} parent=5 // pred_check_branch
      %279 = sbr.rel (%p277) target = $region44
    $region43: #{tpu_custom_call.1} parent=5 // pred_region
      // Predicated region
      $region45: #{tpu_custom_call.1} parent=43 // pred_check
        %p280 = pneg %p35
      $region46: #{tpu_custom_call.1} parent=43 // pred_check_branch
        %282 = sbr.rel (%p280) target = $region48
      $region47: #{tpu_custom_call.1} parent=43 // pred_region
        %s283 = smul.u32 16, %s15
        %p284 = scmp.lt.s32.totalorder %s283, 31
        %s285 = scalar_select %p284, %s283, 31
        %s286 = smul.addr %s285, 8
        %s287 = scalar_lea.vmem %s0, %s286
        %s288 = smul.u32 16, %s15
      $region48: #{tpu_custom_call.1} parent=43 // pred_fallthru
        _
      // Predicated region
      $region49: #{tpu_custom_call.1} parent=43 // pred_check
        %p289 = pneg %p61
      $region50: #{tpu_custom_call.1} parent=43 // pred_check_branch
        %291 = sbr.rel (%p289) target = $region52
      $region51: #{tpu_custom_call.1} parent=43 // pred_region
        %s292 = smul.u32 16, %s15
        %p293 = scmp.lt.s32.totalorder %s292, 31
        %s294 = scalar_select %p293, %s292, 31
        %s295 = smul.addr %s294, 8
        %s296 = scalar_lea.vmem %s1, %s295
        %s297 = smul.u32 16, %s15
      $region52: #{tpu_custom_call.1} parent=43 // pred_fallthru
        _
    $region44: #{tpu_custom_call.1} parent=5 // pred_fallthru
      _
    %p298 = scmp.le.s32.totalorder 1, %s15
    %p299 = scmp.lt.s32.totalorder %s15, 3
    %p300 = pnand %p298, %p299
    %p301 = pneg %p300
    // Predicated region
    $region53: #{tpu_custom_call.1} parent=5 // pred_check
      _
    $region54: #{tpu_custom_call.1} parent=5 // pred_check_branch
      %303 = sbr.rel (%p300) target = $region56
    $region55: #{tpu_custom_call.1} parent=5 // pred_region
      %s304 = ssub.s32 %s15, 1
      %s305 = smul.u32 16, %s20
      %p306 = scmp.lt.s32.totalorder %s305, 31
      %s307 = scalar_select %p306, %s305, 31
      %s308 = smul.addr %s307, 8
      %s309 = scalar_lea.vmem %s0, %s308
      %p310 = pneg %p41
      %p311 = pneg %p38
      %s312 = smul.u32 16, %s20
      %p313 = scmp.lt.s32.totalorder %s312, 31
      %s314 = scalar_select %p313, %s312, 31
      %s315 = smul.addr %s314, 8
      %s316 = scalar_lea.vmem %s1, %s315
      %p317 = pneg %p67
      %p318 = pneg %p64
      %p319 = pneg %p88
      %p320 = pneg %p85
      %p321 = pneg %p109
      %p322 = pneg %p106
      %p323 = pneg %p130
      %p324 = pneg %p127
      %p325 = pneg %p151
      %p326 = pneg %p148
      %p327 = pneg %p172
      %p328 = pneg %p169
      %p329 = pneg %p193
      %p330 = pneg %p190
      %p331 = pneg %p214
      %p332 = pneg %p211
      %p333 = pneg %p240
      %p334 = pneg %p237
      %s335 = smul.u32 16, %s20
      %p336 = scmp.lt.s32.totalorder %s335, 31
      %s337 = scalar_select %p336, %s335, 31
      %s338 = smul.addr %s337, 8
      %s339 = scalar_lea.vmem %s9, %s338
      %s340 = smul.u32 16, %s20
      %p341 = scmp.lt.s32.totalorder %s340, 31
      %s342 = scalar_select %p341, %s340, 31
      %s343 = smul.addr %s342, 8
      %s344 = scalar_lea.vmem %s0, %s343
      %s345 = smul.u32 16, %s20
      %s346 = smul.u32 16, %s20
      %p347 = scmp.lt.s32.totalorder %s346, 31
      %s348 = scalar_select %p347, %s346, 31
      %s349 = smul.addr %s348, 8
      %s350 = scalar_lea.vmem %s1, %s349
      %s351 = smul.u32 16, %s20
      %s352 = smul.u32 16, %s20
      %p353 = scmp.lt.s32.totalorder %s352, 31
      %s354 = scalar_select %p353, %s352, 31
      %s355 = smul.addr %s354, 8
      %s356 = scalar_lea.vmem %s9, %s355
      %s357 = smul.u32 16, %s20
      %v359 = vld [vmem:[%s344] sm:$0xff]
      %v360 = vld [vmem:[%s344 + $0x8] sm:$0xff]
      %v361 = vld [vmem:[%s344 + $0x10] sm:$0xff]
      %v362 = vld [vmem:[%s344 + $0x18] sm:$0xff]
      %v363 = vld [vmem:[%s344 + $0x20] sm:$0xff]
      %v364 = vld [vmem:[%s344 + $0x28] sm:$0xff]
      %v365 = vld [vmem:[%s344 + $0x30] sm:$0xff]
      %v366 = vld [vmem:[%s344 + $0x38] sm:$0xff]
      %v367 = vld [vmem:[%s344 + $0x40] sm:$0xff]
      %v368 = vld [vmem:[%s344 + $0x48] sm:$0xff]
      %v369 = vld [vmem:[%s344 + $0x50] sm:$0xff]
      %v370 = vld [vmem:[%s344 + $0x58] sm:$0xff]
      %v371 = vld [vmem:[%s344 + $0x60] sm:$0xff]
      %v372 = vld [vmem:[%s344 + $0x68] sm:$0xff]
      %v373 = vld [vmem:[%s344 + $0x70] sm:$0xff]
      %v374 = vld [vmem:[%s344 + $0x78] sm:$0xff]
      %v375 = vpack.c.bf16 %v360, %v359
      %v376 = vpack.c.bf16 %v362, %v361
      %v377 = vpack.c.bf16 %v364, %v363
      %v378 = vpack.c.bf16 %v366, %v365
      %v379 = vpack.c.bf16 %v368, %v367
      %v380 = vpack.c.bf16 %v370, %v369
      %v381 = vpack.c.bf16 %v372, %v371
      %v382 = vpack.c.bf16 %v374, %v373
      %v383 = vld [vmem:[%s2] sm:$0x1]
      %v384 = vld [vmem:[%s350] sm:$0xff]
      %v385 = vld [vmem:[%s350 + $0x8] sm:$0xff]
      %v386 = vld [vmem:[%s350 + $0x10] sm:$0xff]
      %v387 = vld [vmem:[%s350 + $0x18] sm:$0xff]
      %v388 = vld [vmem:[%s350 + $0x20] sm:$0xff]
      %v389 = vld [vmem:[%s350 + $0x28] sm:$0xff]
      %v390 = vld [vmem:[%s350 + $0x30] sm:$0xff]
      %v391 = vld [vmem:[%s350 + $0x38] sm:$0xff]
      %v392 = vld [vmem:[%s350 + $0x40] sm:$0xff]
      %v393 = vld [vmem:[%s350 + $0x48] sm:$0xff]
      %v394 = vld [vmem:[%s350 + $0x50] sm:$0xff]
      %v395 = vld [vmem:[%s350 + $0x58] sm:$0xff]
      %v396 = vld [vmem:[%s350 + $0x60] sm:$0xff]
      %v397 = vld [vmem:[%s350 + $0x68] sm:$0xff]
      %v398 = vld [vmem:[%s350 + $0x70] sm:$0xff]
      %v399 = vld [vmem:[%s350 + $0x78] sm:$0xff]
      %v400 = vpack.c.bf16 %v385, %v384
      %v401 = vpack.c.bf16 %v387, %v386
      %v402 = vpack.c.bf16 %v389, %v388
      %v403 = vpack.c.bf16 %v391, %v390
      %v404 = vpack.c.bf16 %v393, %v392
      %v405 = vpack.c.bf16 %v395, %v394
      %v406 = vpack.c.bf16 %v397, %v396
      %v407 = vpack.c.bf16 %v399, %v398
      %v408 = vld [vmem:[%s3] sm:$0xf]
      %v409 = vld [vmem:[%s3 + $0x4] sm:$0xf]
      %v412 = vunpack.c.l.b16 %v408
      %v413 = vunpack.c.l.b16 %v409
      %v414 = vpack.c.b16 %v413, %v412
      %vm416 = vcmask 130048
      %v418 = vsel %vm416, %v400, 0
      %v421 = vsel %vm416, %v401, 0
      %v424 = vsel %vm416, %v402, 0
      %v427 = vsel %vm416, %v403, 0
      %v430 = vsel %vm416, %v404, 0
      %v433 = vsel %vm416, %v405, 0
      %v436 = vsel %vm416, %v406, 0
      %v439 = vsel %vm416, %v407, 0
      %441 = vmatpush.bf16.msra.mxu0 0
      %442 = vmatpush.bf16.msra.mxu0 0
      %443 = vmatpush.bf16.msra.mxu0 0
      %444 = vmatpush.bf16.msra.mxu0 0
      %445 = vmatpush.bf16.msra.mxu0 0
      %446 = vmatpush.bf16.msra.mxu0 0
      %447 = vmatpush.bf16.msra.mxu0 0
      %448 = vmatpush.bf16.msra.mxu0 %v414
      %449 = vmatmul.bf16.gmra.mxu0 %v418
      %v450 = vpop.f32.mrf.mxu0
      %v451 = vadd.f32 0.0, %v450
      %v452 = vpop.f32.mrf.mxu0
      %v453 = vadd.f32 0.0, %v452
      %454 = vmatmul.bf16.gmra.mxu0 %v421
      %v455 = vpop.f32.mrf.mxu0
      %v456 = vadd.f32 0.0, %v455
      %v457 = vpop.f32.mrf.mxu0
      %v458 = vadd.f32 0.0, %v457
      %459 = vmatmul.bf16.gmra.mxu0 %v424
      %v460 = vpop.f32.mrf.mxu0
      %v461 = vadd.f32 0.0, %v460
      %v462 = vpop.f32.mrf.mxu0
      %v463 = vadd.f32 0.0, %v462
      %464 = vmatmul.bf16.gmra.mxu0 %v427
      %v465 = vpop.f32.mrf.mxu0
      %v466 = vadd.f32 0.0, %v465
      %v467 = vpop.f32.mrf.mxu0
      %v468 = vadd.f32 0.0, %v467
      %469 = vmatmul.bf16.gmra.mxu0 %v430
      %v470 = vpop.f32.mrf.mxu0
      %v471 = vadd.f32 0.0, %v470
      %v472 = vpop.f32.mrf.mxu0
      %v473 = vadd.f32 0.0, %v472
      %474 = vmatmul.bf16.gmra.mxu0 %v433
      %v475 = vpop.f32.mrf.mxu0
      %v476 = vadd.f32 0.0, %v475
      %v477 = vpop.f32.mrf.mxu0
      %v478 = vadd.f32 0.0, %v477
      %479 = vmatmul.bf16.gmra.mxu0 %v436
      %v480 = vpop.f32.mrf.mxu0
      %v481 = vadd.f32 0.0, %v480
      %v482 = vpop.f32.mrf.mxu0
      %v483 = vadd.f32 0.0, %v482
      %484 = vmatmul.bf16.gmra.mxu0 %v439
      %v485 = vpop.f32.mrf.mxu0
      %v486 = vadd.f32 0.0, %v485
      %v487 = vpop.f32.mrf.mxu0
      %v488 = vadd.f32 0.0, %v487
      %489 = vdwg.mxu0
      %vm490 = vcmask 15360
      %v492 = vsel %vm490, %v375, 0
      %v495 = vsel %vm490, %v376, 0
      %v498 = vsel %vm490, %v377, 0
      %v501 = vsel %vm490, %v378, 0
      %v504 = vsel %vm490, %v379, 0
      %v507 = vsel %vm490, %v380, 0
      %v510 = vsel %vm490, %v381, 0
      %v513 = vsel %vm490, %v382, 0
      %vm515 = vcmask 1040384
      %v517 = vsel %vm515, %v383, 0
      %519 = vmatpush.bf16.msra.mxu0 0
      %520 = vmatpush.bf16.msra.mxu0 0
      %521 = vmatpush.bf16.msra.mxu0 0
      %522 = vmatpush.bf16.msra.mxu0 0
      %523 = vmatpush.bf16.msra.mxu0 0
      %524 = vmatpush.bf16.msra.mxu0 0
      %525 = vmatpush.bf16.msra.mxu0 0
      %526 = vmatpush.bf16.msra.mxu0 %v517
      %527 = vmatmul.bf16.gmra.mxu0 %v492
      %v528 = vpop.f32.mrf.mxu0
      %v529 = vadd.f32 %v451, %v528
      %v530 = vpop.f32.mrf.mxu0
      %v531 = vadd.f32 %v453, %v530
      %532 = vmatmul.bf16.gmra.mxu0 %v495
      %v533 = vpop.f32.mrf.mxu0
      %v534 = vadd.f32 %v456, %v533
      %v535 = vpop.f32.mrf.mxu0
      %v536 = vadd.f32 %v458, %v535
      %537 = vmatmul.bf16.gmra.mxu0 %v498
      %v538 = vpop.f32.mrf.mxu0
      %v539 = vadd.f32 %v461, %v538
      %v540 = vpop.f32.mrf.mxu0
      %v541 = vadd.f32 %v463, %v540
      %542 = vmatmul.bf16.gmra.mxu0 %v501
      %v543 = vpop.f32.mrf.mxu0
      %v544 = vadd.f32 %v466, %v543
      %v545 = vpop.f32.mrf.mxu0
      %v546 = vadd.f32 %v468, %v545
      %547 = vmatmul.bf16.gmra.mxu0 %v504
      %v548 = vpop.f32.mrf.mxu0
      %v549 = vadd.f32 %v471, %v548
      %v550 = vpop.f32.mrf.mxu0
      %v551 = vadd.f32 %v473, %v550
      %552 = vmatmul.bf16.gmra.mxu0 %v507
      %v553 = vpop.f32.mrf.mxu0
      %v554 = vadd.f32 %v476, %v553
      %v555 = vpop.f32.mrf.mxu0
      %v556 = vadd.f32 %v478, %v555
      %557 = vmatmul.bf16.gmra.mxu0 %v510
      %v558 = vpop.f32.mrf.mxu0
      %v559 = vadd.f32 %v481, %v558
      %v560 = vpop.f32.mrf.mxu0
      %v561 = vadd.f32 %v483, %v560
      %562 = vmatmul.bf16.gmra.mxu0 %v513
      %v563 = vpop.f32.mrf.mxu0
      %v564 = vadd.f32 %v486, %v563
      %v565 = vpop.f32.mrf.mxu0
      %v566 = vadd.f32 %v488, %v565
      %567 = vdwg.mxu0
      %v568 = vld [vmem:[%s4] sm:$0x1]
      %v570 = vperm.slane %v568, 0
      %v572 = vadd.f32 %v529, %v570
      %v573 = vadd.f32 %v531, %v570
      %v574 = vadd.f32 %v534, %v570
      %v575 = vadd.f32 %v536, %v570
      %v576 = vadd.f32 %v539, %v570
      %v577 = vadd.f32 %v541, %v570
      %v578 = vadd.f32 %v544, %v570
      %v579 = vadd.f32 %v546, %v570
      %v580 = vadd.f32 %v549, %v570
      %v581 = vadd.f32 %v551, %v570
      %v582 = vadd.f32 %v554, %v570
      %v583 = vadd.f32 %v556, %v570
      %v584 = vadd.f32 %v559, %v570
      %v585 = vadd.f32 %v561, %v570
      %v586 = vadd.f32 %v564, %v570
      %v587 = vadd.f32 %v566, %v570
      %v588 = vmax.f32 %v572, 0.0
      %v589 = vmax.f32 %v573, 0.0
      %v590 = vmax.f32 %v574, 0.0
      %v591 = vmax.f32 %v575, 0.0
      %v592 = vmax.f32 %v576, 0.0
      %v593 = vmax.f32 %v577, 0.0
      %v594 = vmax.f32 %v578, 0.0
      %v595 = vmax.f32 %v579, 0.0
      %v596 = vmax.f32 %v580, 0.0
      %v597 = vmax.f32 %v581, 0.0
      %v598 = vmax.f32 %v582, 0.0
      %v599 = vmax.f32 %v583, 0.0
      %v600 = vmax.f32 %v584, 0.0
      %v601 = vmax.f32 %v585, 0.0
      %v602 = vmax.f32 %v586, 0.0
      %v603 = vmax.f32 %v587, 0.0
      %v604 = vpack.c.bf16 %v589, %v588
      %v605 = vpack.c.bf16 %v591, %v590
      %v606 = vpack.c.bf16 %v593, %v592
      %v607 = vpack.c.bf16 %v595, %v594
      %v608 = vpack.c.bf16 %v597, %v596
      %v609 = vpack.c.bf16 %v599, %v598
      %v610 = vpack.c.bf16 %v601, %v600
      %v611 = vpack.c.bf16 %v603, %v602
      %v612 = vld [vmem:[%s5] sm:$0xf]
      %v613 = vld [vmem:[%s5 + $0x4] sm:$0xf]
      %v614 = vld [vmem:[%s5 + $0x8] sm:$0xf]
      %v615 = vld [vmem:[%s5 + $0xc] sm:$0xf]
      %v616 = vld [vmem:[%s6] sm:$0x1]
      %v618 = vperm.slane %v616, 0
      %v624 = vunpack.c.l.b16 %v612
      %v625 = vunpack.c.l.b16 %v613
      %v626 = vunpack.c.l.b16 %v614
      %v627 = vunpack.c.l.b16 %v615
      %v628 = vpack.c.b16 %v625, %v624
      %v629 = vpack.c.b16 %v627, %v626
      %vm632 = vcmask 261120
      %v634 = vsel %vm632, %v604, 0
      %v637 = vsel %vm632, %v605, 0
      %v640 = vsel %vm632, %v606, 0
      %v643 = vsel %vm632, %v607, 0
      %v646 = vsel %vm632, %v608, 0
      %v649 = vsel %vm632, %v609, 0
      %v652 = vsel %vm632, %v610, 0
      %v655 = vsel %vm632, %v611, 0
      %657 = vmatpush.bf16.msra.mxu0 0
      %658 = vmatpush.bf16.msra.mxu0 0
      %659 = vmatpush.bf16.msra.mxu0 0
      %660 = vmatpush.bf16.msra.mxu0 0
      %661 = vmatpush.bf16.msra.mxu0 0
      %662 = vmatpush.bf16.msra.mxu0 0
      %663 = vmatpush.bf16.msra.mxu0 %v629
      %664 = vmatpush.bf16.msra.mxu0 %v628
      %665 = vmatmul.bf16.gmra.mxu0 %v634
      %v666 = vpop.f32.mrf.mxu0
      %v667 = vadd.f32 %v618, %v666
      %v668 = vpop.f32.mrf.mxu0
      %v669 = vadd.f32 %v618, %v668
      %670 = vmatmul.bf16.gmra.mxu0 %v637
      %v671 = vpop.f32.mrf.mxu0
      %v672 = vadd.f32 %v618, %v671
      %v673 = vpop.f32.mrf.mxu0
      %v674 = vadd.f32 %v618, %v673
      %675 = vmatmul.bf16.gmra.mxu0 %v640
      %v676 = vpop.f32.mrf.mxu0
      %v677 = vadd.f32 %v618, %v676
      %v678 = vpop.f32.mrf.mxu0
      %v679 = vadd.f32 %v618, %v678
      %680 = vmatmul.bf16.gmra.mxu0 %v643
      %v681 = vpop.f32.mrf.mxu0
      %v682 = vadd.f32 %v618, %v681
      %v683 = vpop.f32.mrf.mxu0
      %v684 = vadd.f32 %v618, %v683
      %685 = vmatmul.bf16.gmra.mxu0 %v646
      %v686 = vpop.f32.mrf.mxu0
      %v687 = vadd.f32 %v618, %v686
      %v688 = vpop.f32.mrf.mxu0
      %v689 = vadd.f32 %v618, %v688
      %690 = vmatmul.bf16.gmra.mxu0 %v649
      %v691 = vpop.f32.mrf.mxu0
      %v692 = vadd.f32 %v618, %v691
      %v693 = vpop.f32.mrf.mxu0
      %v694 = vadd.f32 %v618, %v693
      %695 = vmatmul.bf16.gmra.mxu0 %v652
      %v696 = vpop.f32.mrf.mxu0
      %v697 = vadd.f32 %v618, %v696
      %v698 = vpop.f32.mrf.mxu0
      %v699 = vadd.f32 %v618, %v698
      %700 = vmatmul.bf16.gmra.mxu0 %v655
      %v701 = vpop.f32.mrf.mxu0
      %v702 = vadd.f32 %v618, %v701
      %v703 = vpop.f32.mrf.mxu0
      %v704 = vadd.f32 %v618, %v703
      %705 = vdwg.mxu0
      %v706 = vmax.f32 %v667, 0.0
      %v707 = vmax.f32 %v669, 0.0
      %v708 = vmax.f32 %v672, 0.0
      %v709 = vmax.f32 %v674, 0.0
      %v710 = vmax.f32 %v677, 0.0
      %v711 = vmax.f32 %v679, 0.0
      %v712 = vmax.f32 %v682, 0.0
      %v713 = vmax.f32 %v684, 0.0
      %v714 = vmax.f32 %v687, 0.0
      %v715 = vmax.f32 %v689, 0.0
      %v716 = vmax.f32 %v692, 0.0
      %v717 = vmax.f32 %v694, 0.0
      %v718 = vmax.f32 %v697, 0.0
      %v719 = vmax.f32 %v699, 0.0
      %v720 = vmax.f32 %v702, 0.0
      %v721 = vmax.f32 %v704, 0.0
      %v722 = vpack.c.bf16 %v707, %v706
      %v723 = vpack.c.bf16 %v709, %v708
      %v724 = vpack.c.bf16 %v711, %v710
      %v725 = vpack.c.bf16 %v713, %v712
      %v726 = vpack.c.bf16 %v715, %v714
      %v727 = vpack.c.bf16 %v717, %v716
      %v728 = vpack.c.bf16 %v719, %v718
      %v729 = vpack.c.bf16 %v721, %v720
      %s730 = scalar_lea.vmem %s5, 16
      %v731 = vld [vmem:[%s730] sm:$0xf]
      %v732 = vld [vmem:[%s730 + $0x4] sm:$0xf]
      %v733 = vld [vmem:[%s730 + $0x8] sm:$0xf]
      %v734 = vld [vmem:[%s730 + $0xc] sm:$0xf]
      %s735 = scalar_lea.vmem %s6, 1
      %v736 = vld [vmem:[%s735] sm:$0x1]
      %v738 = vperm.slane %v736, 0
      %v744 = vunpack.c.l.b16 %v731
      %v745 = vunpack.c.l.b16 %v732
      %v746 = vunpack.c.l.b16 %v733
      %v747 = vunpack.c.l.b16 %v734
      %v748 = vpack.c.b16 %v745, %v744
      %v749 = vpack.c.b16 %v747, %v746
      %v753 = vsel %vm632, %v722, 0
      %v756 = vsel %vm632, %v723, 0
      %v759 = vsel %vm632, %v724, 0
      %v762 = vsel %vm632, %v725, 0
      %v765 = vsel %vm632, %v726, 0
      %v768 = vsel %vm632, %v727, 0
      %v771 = vsel %vm632, %v728, 0
      %v774 = vsel %vm632, %v729, 0
      %776 = vmatpush.bf16.msra.mxu0 0
      %777 = vmatpush.bf16.msra.mxu0 0
      %778 = vmatpush.bf16.msra.mxu0 0
      %779 = vmatpush.bf16.msra.mxu0 0
      %780 = vmatpush.bf16.msra.mxu0 0
      %781 = vmatpush.bf16.msra.mxu0 0
      %782 = vmatpush.bf16.msra.mxu0 %v749
      %783 = vmatpush.bf16.msra.mxu0 %v748
      %784 = vmatmul.bf16.gmra.mxu0 %v753
      %v785 = vpop.f32.mrf.mxu0
      %v786 = vadd.f32 %v738, %v785
      %v787 = vpop.f32.mrf.mxu0
      %v788 = vadd.f32 %v738, %v787
      %789 = vmatmul.bf16.gmra.mxu0 %v756
      %v790 = vpop.f32.mrf.mxu0
      %v791 = vadd.f32 %v738, %v790
      %v792 = vpop.f32.mrf.mxu0
      %v793 = vadd.f32 %v738, %v792
      %794 = vmatmul.bf16.gmra.mxu0 %v759
      %v795 = vpop.f32.mrf.mxu0
      %v796 = vadd.f32 %v738, %v795
      %v797 = vpop.f32.mrf.mxu0
      %v798 = vadd.f32 %v738, %v797
      %799 = vmatmul.bf16.gmra.mxu0 %v762
      %v800 = vpop.f32.mrf.mxu0
      %v801 = vadd.f32 %v738, %v800
      %v802 = vpop.f32.mrf.mxu0
      %v803 = vadd.f32 %v738, %v802
      %804 = vmatmul.bf16.gmra.mxu0 %v765
      %v805 = vpop.f32.mrf.mxu0
      %v806 = vadd.f32 %v738, %v805
      %v807 = vpop.f32.mrf.mxu0
      %v808 = vadd.f32 %v738, %v807
      %809 = vmatmul.bf16.gmra.mxu0 %v768
      %v810 = vpop.f32.mrf.mxu0
      %v811 = vadd.f32 %v738, %v810
      %v812 = vpop.f32.mrf.mxu0
      %v813 = vadd.f32 %v738, %v812
      %814 = vmatmul.bf16.gmra.mxu0 %v771
      %v815 = vpop.f32.mrf.mxu0
      %v816 = vadd.f32 %v738, %v815
      %v817 = vpop.f32.mrf.mxu0
      %v818 = vadd.f32 %v738, %v817
      %819 = vmatmul.bf16.gmra.mxu0 %v774
      %v820 = vpop.f32.mrf.mxu0
      %v821 = vadd.f32 %v738, %v820
      %v822 = vpop.f32.mrf.mxu0
      %v823 = vadd.f32 %v738, %v822
      %824 = vdwg.mxu0
      %v825 = vmax.f32 %v786, 0.0
      %v826 = vmax.f32 %v788, 0.0
      %v827 = vmax.f32 %v791, 0.0
      %v828 = vmax.f32 %v793, 0.0
      %v829 = vmax.f32 %v796, 0.0
      %v830 = vmax.f32 %v798, 0.0
      %v831 = vmax.f32 %v801, 0.0
      %v832 = vmax.f32 %v803, 0.0
      %v833 = vmax.f32 %v806, 0.0
      %v834 = vmax.f32 %v808, 0.0
      %v835 = vmax.f32 %v811, 0.0
      %v836 = vmax.f32 %v813, 0.0
      %v837 = vmax.f32 %v816, 0.0
      %v838 = vmax.f32 %v818, 0.0
      %v839 = vmax.f32 %v821, 0.0
      %v840 = vmax.f32 %v823, 0.0
      %v841 = vpack.c.bf16 %v826, %v825
      %v842 = vpack.c.bf16 %v828, %v827
      %v843 = vpack.c.bf16 %v830, %v829
      %v844 = vpack.c.bf16 %v832, %v831
      %v845 = vpack.c.bf16 %v834, %v833
      %v846 = vpack.c.bf16 %v836, %v835
      %v847 = vpack.c.bf16 %v838, %v837
      %v848 = vpack.c.bf16 %v840, %v839
      %s849 = scalar_lea.vmem %s5, 32
      %v850 = vld [vmem:[%s849] sm:$0xf]
      %v851 = vld [vmem:[%s849 + $0x4] sm:$0xf]
      %v852 = vld [vmem:[%s849 + $0x8] sm:$0xf]
      %v853 = vld [vmem:[%s849 + $0xc] sm:$0xf]
      %s854 = scalar_lea.vmem %s6, 2
      %v855 = vld [vmem:[%s854] sm:$0x1]
      %v857 = vperm.slane %v855, 0
      %v863 = vunpack.c.l.b16 %v850
      %v864 = vunpack.c.l.b16 %v851
      %v865 = vunpack.c.l.b16 %v852
      %v866 = vunpack.c.l.b16 %v853
      %v867 = vpack.c.b16 %v864, %v863
      %v868 = vpack.c.b16 %v866, %v865
      %v872 = vsel %vm632, %v841, 0
      %v875 = vsel %vm632, %v842, 0
      %v878 = vsel %vm632, %v843, 0
      %v881 = vsel %vm632, %v844, 0
      %v884 = vsel %vm632, %v845, 0
      %v887 = vsel %vm632, %v846, 0
      %v890 = vsel %vm632, %v847, 0
      %v893 = vsel %vm632, %v848, 0
      %895 = vmatpush.bf16.msra.mxu0 0
      %896 = vmatpush.bf16.msra.mxu0 0
      %897 = vmatpush.bf16.msra.mxu0 0
      %898 = vmatpush.bf16.msra.mxu0 0
      %899 = vmatpush.bf16.msra.mxu0 0
      %900 = vmatpush.bf16.msra.mxu0 0
      %901 = vmatpush.bf16.msra.mxu0 %v868
      %902 = vmatpush.bf16.msra.mxu0 %v867
      %903 = vmatmul.bf16.gmra.mxu0 %v872
      %v904 = vpop.f32.mrf.mxu0
      %v905 = vadd.f32 %v857, %v904
      %v906 = vpop.f32.mrf.mxu0
      %v907 = vadd.f32 %v857, %v906
      %908 = vmatmul.bf16.gmra.mxu0 %v875
      %v909 = vpop.f32.mrf.mxu0
      %v910 = vadd.f32 %v857, %v909
      %v911 = vpop.f32.mrf.mxu0
      %v912 = vadd.f32 %v857, %v911
      %913 = vmatmul.bf16.gmra.mxu0 %v878
      %v914 = vpop.f32.mrf.mxu0
      %v915 = vadd.f32 %v857, %v914
      %v916 = vpop.f32.mrf.mxu0
      %v917 = vadd.f32 %v857, %v916
      %918 = vmatmul.bf16.gmra.mxu0 %v881
      %v919 = vpop.f32.mrf.mxu0
      %v920 = vadd.f32 %v857, %v919
      %v921 = vpop.f32.mrf.mxu0
      %v922 = vadd.f32 %v857, %v921
      %923 = vmatmul.bf16.gmra.mxu0 %v884
      %v924 = vpop.f32.mrf.mxu0
      %v925 = vadd.f32 %v857, %v924
      %v926 = vpop.f32.mrf.mxu0
      %v927 = vadd.f32 %v857, %v926
      %928 = vmatmul.bf16.gmra.mxu0 %v887
      %v929 = vpop.f32.mrf.mxu0
      %v930 = vadd.f32 %v857, %v929
      %v931 = vpop.f32.mrf.mxu0
      %v932 = vadd.f32 %v857, %v931
      %933 = vmatmul.bf16.gmra.mxu0 %v890
      %v934 = vpop.f32.mrf.mxu0
      %v935 = vadd.f32 %v857, %v934
      %v936 = vpop.f32.mrf.mxu0
      %v937 = vadd.f32 %v857, %v936
      %938 = vmatmul.bf16.gmra.mxu0 %v893
      %v939 = vpop.f32.mrf.mxu0
      %v940 = vadd.f32 %v857, %v939
      %v941 = vpop.f32.mrf.mxu0
      %v942 = vadd.f32 %v857, %v941
      %943 = vdwg.mxu0
      %v944 = vmax.f32 %v905, 0.0
      %v945 = vmax.f32 %v907, 0.0
      %v946 = vmax.f32 %v910, 0.0
      %v947 = vmax.f32 %v912, 0.0
      %v948 = vmax.f32 %v915, 0.0
      %v949 = vmax.f32 %v917, 0.0
      %v950 = vmax.f32 %v920, 0.0
      %v951 = vmax.f32 %v922, 0.0
      %v952 = vmax.f32 %v925, 0.0
      %v953 = vmax.f32 %v927, 0.0
      %v954 = vmax.f32 %v930, 0.0
      %v955 = vmax.f32 %v932, 0.0
      %v956 = vmax.f32 %v935, 0.0
      %v957 = vmax.f32 %v937, 0.0
      %v958 = vmax.f32 %v940, 0.0
      %v959 = vmax.f32 %v942, 0.0
      %v960 = vpack.c.bf16 %v945, %v944
      %v961 = vpack.c.bf16 %v947, %v946
      %v962 = vpack.c.bf16 %v949, %v948
      %v963 = vpack.c.bf16 %v951, %v950
      %v964 = vpack.c.bf16 %v953, %v952
      %v965 = vpack.c.bf16 %v955, %v954
      %v966 = vpack.c.bf16 %v957, %v956
      %v967 = vpack.c.bf16 %v959, %v958
      %s968 = scalar_lea.vmem %s5, 48
      %v969 = vld [vmem:[%s968] sm:$0xf]
      %v970 = vld [vmem:[%s968 + $0x4] sm:$0xf]
      %v971 = vld [vmem:[%s968 + $0x8] sm:$0xf]
      %v972 = vld [vmem:[%s968 + $0xc] sm:$0xf]
      %s973 = scalar_lea.vmem %s6, 3
      %v974 = vld [vmem:[%s973] sm:$0x1]
      %v976 = vperm.slane %v974, 0
      %v982 = vunpack.c.l.b16 %v969
      %v983 = vunpack.c.l.b16 %v970
      %v984 = vunpack.c.l.b16 %v971
      %v985 = vunpack.c.l.b16 %v972
      %v986 = vpack.c.b16 %v983, %v982
      %v987 = vpack.c.b16 %v985, %v984
      %v991 = vsel %vm632, %v960, 0
      %v994 = vsel %vm632, %v961, 0
      %v997 = vsel %vm632, %v962, 0
      %v1000 = vsel %vm632, %v963, 0
      %v1003 = vsel %vm632, %v964, 0
      %v1006 = vsel %vm632, %v965, 0
      %v1009 = vsel %vm632, %v966, 0
      %v1012 = vsel %vm632, %v967, 0
      %1014 = vmatpush.bf16.msra.mxu0 0
      %1015 = vmatpush.bf16.msra.mxu0 0
      %1016 = vmatpush.bf16.msra.mxu0 0
      %1017 = vmatpush.bf16.msra.mxu0 0
      %1018 = vmatpush.bf16.msra.mxu0 0
      %1019 = vmatpush.bf16.msra.mxu0 0
      %1020 = vmatpush.bf16.msra.mxu0 %v987
      %1021 = vmatpush.bf16.msra.mxu0 %v986
      %1022 = vmatmul.bf16.gmra.mxu0 %v991
      %v1023 = vpop.f32.mrf.mxu0
      %v1024 = vadd.f32 %v976, %v1023
      %v1025 = vpop.f32.mrf.mxu0
      %v1026 = vadd.f32 %v976, %v1025
      %1027 = vmatmul.bf16.gmra.mxu0 %v994
      %v1028 = vpop.f32.mrf.mxu0
      %v1029 = vadd.f32 %v976, %v1028
      %v1030 = vpop.f32.mrf.mxu0
      %v1031 = vadd.f32 %v976, %v1030
      %1032 = vmatmul.bf16.gmra.mxu0 %v997
      %v1033 = vpop.f32.mrf.mxu0
      %v1034 = vadd.f32 %v976, %v1033
      %v1035 = vpop.f32.mrf.mxu0
      %v1036 = vadd.f32 %v976, %v1035
      %1037 = vmatmul.bf16.gmra.mxu0 %v1000
      %v1038 = vpop.f32.mrf.mxu0
      %v1039 = vadd.f32 %v976, %v1038
      %v1040 = vpop.f32.mrf.mxu0
      %v1041 = vadd.f32 %v976, %v1040
      %1042 = vmatmul.bf16.gmra.mxu0 %v1003
      %v1043 = vpop.f32.mrf.mxu0
      %v1044 = vadd.f32 %v976, %v1043
      %v1045 = vpop.f32.mrf.mxu0
      %v1046 = vadd.f32 %v976, %v1045
      %1047 = vmatmul.bf16.gmra.mxu0 %v1006
      %v1048 = vpop.f32.mrf.mxu0
      %v1049 = vadd.f32 %v976, %v1048
      %v1050 = vpop.f32.mrf.mxu0
      %v1051 = vadd.f32 %v976, %v1050
      %1052 = vmatmul.bf16.gmra.mxu0 %v1009
      %v1053 = vpop.f32.mrf.mxu0
      %v1054 = vadd.f32 %v976, %v1053
      %v1055 = vpop.f32.mrf.mxu0
      %v1056 = vadd.f32 %v976, %v1055
      %1057 = vmatmul.bf16.gmra.mxu0 %v1012
      %v1058 = vpop.f32.mrf.mxu0
      %v1059 = vadd.f32 %v976, %v1058
      %v1060 = vpop.f32.mrf.mxu0
      %v1061 = vadd.f32 %v976, %v1060
      %1062 = vdwg.mxu0
      %v1063 = vmax.f32 %v1024, 0.0
      %v1064 = vmax.f32 %v1026, 0.0
      %v1065 = vmax.f32 %v1029, 0.0
      %v1066 = vmax.f32 %v1031, 0.0
      %v1067 = vmax.f32 %v1034, 0.0
      %v1068 = vmax.f32 %v1036, 0.0
      %v1069 = vmax.f32 %v1039, 0.0
      %v1070 = vmax.f32 %v1041, 0.0
      %v1071 = vmax.f32 %v1044, 0.0
      %v1072 = vmax.f32 %v1046, 0.0
      %v1073 = vmax.f32 %v1049, 0.0
      %v1074 = vmax.f32 %v1051, 0.0
      %v1075 = vmax.f32 %v1054, 0.0
      %v1076 = vmax.f32 %v1056, 0.0
      %v1077 = vmax.f32 %v1059, 0.0
      %v1078 = vmax.f32 %v1061, 0.0
      %v1079 = vpack.c.bf16 %v1064, %v1063
      %v1080 = vpack.c.bf16 %v1066, %v1065
      %v1081 = vpack.c.bf16 %v1068, %v1067
      %v1082 = vpack.c.bf16 %v1070, %v1069
      %v1083 = vpack.c.bf16 %v1072, %v1071
      %v1084 = vpack.c.bf16 %v1074, %v1073
      %v1085 = vpack.c.bf16 %v1076, %v1075
      %v1086 = vpack.c.bf16 %v1078, %v1077
      %v1087 = vld [vmem:[%s7] sm:$0xf]
      %v1088 = vld [vmem:[%s7 + $0x4] sm:$0xf]
      %v1089 = vld [vmem:[%s7 + $0x8] sm:$0xf]
      %v1090 = vld [vmem:[%s7 + $0xc] sm:$0xf]
      %v1091 = vld [vmem:[%s8] sm:$0x1]
      %v1093 = vperm.slane %v1091, 0
      %v1099 = vunpack.c.l.b16 %v1087
      %v1100 = vunpack.c.l.b16 %v1088
      %v1101 = vunpack.c.l.b16 %v1089
      %v1102 = vunpack.c.l.b16 %v1090
      %v1103 = vpack.c.b16 %v1100, %v1099
      %v1104 = vpack.c.b16 %v1102, %v1101
      %v1108 = vsel %vm632, %v1079, 0
      %v1111 = vsel %vm632, %v1080, 0
      %v1114 = vsel %vm632, %v1081, 0
      %v1117 = vsel %vm632, %v1082, 0
      %v1120 = vsel %vm632, %v1083, 0
      %v1123 = vsel %vm632, %v1084, 0
      %v1126 = vsel %vm632, %v1085, 0
      %v1129 = vsel %vm632, %v1086, 0
      %1131 = vmatpush.bf16.msra.mxu0 0
      %1132 = vmatpush.bf16.msra.mxu0 0
      %1133 = vmatpush.bf16.msra.mxu0 0
      %1134 = vmatpush.bf16.msra.mxu0 0
      %1135 = vmatpush.bf16.msra.mxu0 0
      %1136 = vmatpush.bf16.msra.mxu0 0
      %1137 = vmatpush.bf16.msra.mxu0 %v1104
      %1138 = vmatpush.bf16.msra.mxu0 %v1103
      %1139 = vmatmul.bf16.gmra.mxu0 %v1108
      %v1140 = vpop.f32.mrf.mxu0
      %v1141 = vadd.f32 %v1093, %v1140
      %v1142 = vpop.f32.mrf.mxu0
      %v1143 = vadd.f32 %v1093, %v1142
      %1144 = vmatmul.bf16.gmra.mxu0 %v1111
      %v1145 = vpop.f32.mrf.mxu0
      %v1146 = vadd.f32 %v1093, %v1145
      %v1147 = vpop.f32.mrf.mxu0
      %v1148 = vadd.f32 %v1093, %v1147
      %1149 = vmatmul.bf16.gmra.mxu0 %v1114
      %v1150 = vpop.f32.mrf.mxu0
      %v1151 = vadd.f32 %v1093, %v1150
      %v1152 = vpop.f32.mrf.mxu0
      %v1153 = vadd.f32 %v1093, %v1152
      %1154 = vmatmul.bf16.gmra.mxu0 %v1117
      %v1155 = vpop.f32.mrf.mxu0
      %v1156 = vadd.f32 %v1093, %v1155
      %v1157 = vpop.f32.mrf.mxu0
      %v1158 = vadd.f32 %v1093, %v1157
      %1159 = vmatmul.bf16.gmra.mxu0 %v1120
      %v1160 = vpop.f32.mrf.mxu0
      %v1161 = vadd.f32 %v1093, %v1160
      %v1162 = vpop.f32.mrf.mxu0
      %v1163 = vadd.f32 %v1093, %v1162
      %1164 = vmatmul.bf16.gmra.mxu0 %v1123
      %v1165 = vpop.f32.mrf.mxu0
      %v1166 = vadd.f32 %v1093, %v1165
      %v1167 = vpop.f32.mrf.mxu0
      %v1168 = vadd.f32 %v1093, %v1167
      %1169 = vmatmul.bf16.gmra.mxu0 %v1126
      %v1170 = vpop.f32.mrf.mxu0
      %v1171 = vadd.f32 %v1093, %v1170
      %v1172 = vpop.f32.mrf.mxu0
      %v1173 = vadd.f32 %v1093, %v1172
      %1174 = vmatmul.bf16.gmra.mxu0 %v1129
      %v1175 = vpop.f32.mrf.mxu0
      %v1176 = vadd.f32 %v1093, %v1175
      %v1177 = vpop.f32.mrf.mxu0
      %v1178 = vadd.f32 %v1093, %v1177
      %1179 = vdwg.mxu0
      %v1180 = vadd.f32 %v359, %v1141
      %v1181 = vadd.f32 %v360, %v1143
      %v1182 = vadd.f32 %v361, %v1146
      %v1183 = vadd.f32 %v362, %v1148
      %v1184 = vadd.f32 %v363, %v1151
      %v1185 = vadd.f32 %v364, %v1153
      %v1186 = vadd.f32 %v365, %v1156
      %v1187 = vadd.f32 %v366, %v1158
      %v1188 = vadd.f32 %v367, %v1161
      %v1189 = vadd.f32 %v368, %v1163
      %v1190 = vadd.f32 %v369, %v1166
      %v1191 = vadd.f32 %v370, %v1168
      %v1192 = vadd.f32 %v371, %v1171
      %v1193 = vadd.f32 %v372, %v1173
      %v1194 = vadd.f32 %v373, %v1176
      %v1195 = vadd.f32 %v374, %v1178
      %1196 = vst.msk [vmem:[%s356] sm:$0xff] %vm490, %v1180
      %1197 = vst.msk [vmem:[%s356 + $0x8] sm:$0xff] %vm490, %v1181
      %1198 = vst.msk [vmem:[%s356 + $0x10] sm:$0xff] %vm490, %v1182
      %1199 = vst.msk [vmem:[%s356 + $0x18] sm:$0xff] %vm490, %v1183
      %1200 = vst.msk [vmem:[%s356 + $0x20] sm:$0xff] %vm490, %v1184
      %1201 = vst.msk [vmem:[%s356 + $0x28] sm:$0xff] %vm490, %v1185
      %1202 = vst.msk [vmem:[%s356 + $0x30] sm:$0xff] %vm490, %v1186
      %1203 = vst.msk [vmem:[%s356 + $0x38] sm:$0xff] %vm490, %v1187
      %1204 = vst.msk [vmem:[%s356 + $0x40] sm:$0xff] %vm490, %v1188
      %1205 = vst.msk [vmem:[%s356 + $0x48] sm:$0xff] %vm490, %v1189
      %1206 = vst.msk [vmem:[%s356 + $0x50] sm:$0xff] %vm490, %v1190
      %1207 = vst.msk [vmem:[%s356 + $0x58] sm:$0xff] %vm490, %v1191
      %1208 = vst.msk [vmem:[%s356 + $0x60] sm:$0xff] %vm490, %v1192
      %1209 = vst.msk [vmem:[%s356 + $0x68] sm:$0xff] %vm490, %v1193
      %1210 = vst.msk [vmem:[%s356 + $0x70] sm:$0xff] %vm490, %v1194
      %1211 = vst.msk [vmem:[%s356 + $0x78] sm:$0xff] %vm490, %v1195
      %s1212 = smul.u32 16, %s20
      %p1213 = scmp.lt.s32.totalorder %s1212, 31
      %s1214 = scalar_select %p1213, %s1212, 31
      %s1215 = smul.addr %s1214, 8
      %s1216 = scalar_lea.vmem %s9, %s1215
      // Predicated region
      $region57: #{tpu_custom_call.1} parent=55 // pred_check
        %p1217 = pneg %p237
      $region58: #{tpu_custom_call.1} parent=55 // pred_check_branch
        %1219 = sbr.rel (%p1217) target = $region60
      $region59: #{tpu_custom_call.1} parent=55 // pred_region
        %s1220 = smul.u32 16, %s20
      $region60: #{tpu_custom_call.1} parent=55 // pred_fallthru
        _
    $region56: #{tpu_custom_call.1} parent=5 // pred_fallthru
      _
    %p1221 = scmp.le.s32.totalorder 2, %s15
    // Predicated region
    $region61: #{tpu_custom_call.1} parent=5 // pred_check
      %p1222 = pneg %p1221
    $region62: #{tpu_custom_call.1} parent=5 // pred_check_branch
      %1224 = sbr.rel (%p1222) target = $region64
    $region63: #{tpu_custom_call.1} parent=5 // pred_region
      %s1225 = ssub.s32 %s15, 2
      // Predicated region
      $region65: #{tpu_custom_call.1} parent=63 // pred_check
        %p1226 = pneg %p243
      $region66: #{tpu_custom_call.1} parent=63 // pred_check_branch
        %1228 = sbr.rel (%p1226) target = $region68
      $region67: #{tpu_custom_call.1} parent=63 // pred_region
        %s1229 = smul.u32 16, %s21
        %p1230 = scmp.lt.s32.totalorder %s1229, 31
        %s1231 = scalar_select %p1230, %s1229, 31
        %s1232 = smul.addr %s1231, 8
        %s1233 = scalar_lea.vmem %s9, %s1232
      $region68: #{tpu_custom_call.1} parent=63 // pred_fallthru
        _
    $region64: #{tpu_custom_call.1} parent=5 // pred_fallthru
      _
  $region6: #{tpu_custom_call.1} parent=0 // loop_footer
    %s19 = sadd.s32 1, %s15
  $region7: #{tpu_custom_call.1} parent=0 // loop_footer_branch
    %14 = sbr.rel target = $region3
  $region8: #{tpu_custom_call.1} parent=0 // loop_exit
    _

</llo_original>
